<compile_context>
chip_gen: v6e
topology: v6e:2x2x1
jax: 0.10.0
libtpu: 0.0.40
codegen_flags: <defaults>
</compile_context>

<pallas_src>
import math

import jax
import jax.numpy as jnp
from jax.experimental import pallas as pl
from jax.experimental.pallas import tpu as pltpu


def patch_embed_kernel(x_ref, w_ref, pe_ref, o_ref):
    # x_ref : (tm, patch_len)     bf16 patch rows (B*n_vars*num_patches fused into M)
    # w_ref : (patch_len, d_model) bf16 resident value-embedding weight
    # pe_ref: (tm, d_model)       f32 resident PE block (P-row period tiled to tm;
    #                             tm % P == 0, so block row r is patch index r % P)
    # o_ref : (tm, d_model)       f32 output block (d_model wide, no lane padding)
    acc = jnp.dot(x_ref[...], w_ref[...], preferred_element_type=jnp.float32)
    o_ref[...] = (acc + pe_ref[...]).astype(o_ref.dtype)


def sinusoidal_pe(num_pos, d_model):
    """Same table as the PyTorch PositionalEmbedding buffer (first num_pos rows)."""
    position = jnp.arange(num_pos, dtype=jnp.float32)[:, None]
    div_term = jnp.exp(
        jnp.arange(0, d_model, 2, dtype=jnp.float32) * (-math.log(10000.0) / d_model)
    )
    ang = position * div_term                               # (num_pos, ceil(d/2))
    pe = jnp.zeros((num_pos, d_model), jnp.float32)
    pe = pe.at[:, 0::2].set(jnp.sin(ang))
    pe = pe.at[:, 1::2].set(jnp.cos(ang)[:, : d_model // 2])  # guard odd d_model
    return pe


def _choose_group_tile(G, P, target_rows=2048):
    """Pick g_tile | G so tm = g_tile*P stays sublane-aligned, ~target_rows rows
    per grid step, and >= 2 grid steps when G >= 2 (v7x megacore sharding)."""
    max_tile = max(1, target_rows // max(P, 1))
    if G >= 2:
        max_tile = min(max_tile, max(1, G // 2))
    candidates = [d for d in range(1, min(G, max_tile) + 1) if G % d == 0]
    aligned = [d for d in candidates if (d * P) % 8 == 0]
    if aligned:
        return aligned[-1]
    # Fall back to a single full-extent block (block == full array dim satisfies
    # the (8,128) rule even when G*P is not a multiple of 8).
    return G


def patch_embedding(x, w_value, *, patch_len, stride, padding, d_model):
    """Pallas forward of PatchEmbedding. Returns (patch_features, n_vars)."""
    B, n_vars, L = x.shape

    # --- ReplicationPad1d((0, padding)) ---
    x_pad = jnp.pad(x, ((0, 0), (0, 0), (0, padding)), mode="edge")

    # --- unfold(dim=-1, size=patch_len, step=stride): strided gather (wrapper) ---
    # TODO(synk): stride|patch_len, so this could be fused into shifted contiguous
    # matmuls to avoid materializing the 2x-overlapping patches; not done here.
    P = (L + padding - patch_len) // stride + 1
    idx = jnp.arange(P)[:, None] * stride + jnp.arange(patch_len)[None, :]
    patches = x_pad[:, :, idx]                              # (B, n_vars, P, patch_len)

    G = B * n_vars
    M = G * P

    # bf16 inputs (halves HBM read traffic), f32 accumulation in the MXU.
    patches2d = patches.reshape(M, patch_len).astype(jnp.bfloat16)
    w_bf16 = w_value.astype(jnp.bfloat16)                   # (patch_len, d_model)

    g_tile = _choose_group_tile(G, P)
    tm = g_tile * P                                         # divides M exactly

    # One (tm, d_model) PE block (period P tiled g_tile times), kept resident in
    # VMEM across all grid steps instead of streaming an M-sized PE array.
    pe_block = jnp.tile(sinusoidal_pe(P, d_model), (g_tile, 1))   # (tm, d_model) f32

    out2d = pl.pallas_call(
        patch_embed_kernel,
        out_shape=jax.ShapeDtypeStruct((M, d_model), jnp.float32),
        grid=(M // tm,),
        in_specs=[
            pl.BlockSpec((tm, patch_len), lambda i: (i, 0)),     # fused patch rows
            pl.BlockSpec((patch_len, d_model), lambda i: (0, 0)),  # resident weight
            pl.BlockSpec((tm, d_model), lambda i: (0, 0)),       # resident PE block
        ],
        out_specs=pl.BlockSpec((tm, d_model), lambda i: (i, 0)),
        compiler_params=pltpu.CompilerParams(dimension_semantics=("parallel",)),
    )(patches2d, w_bf16, pe_block)

    # TODO(synk): nn.Dropout is identity in eval mode; training-mode dropout
    # (pltpu.prng_* masking) is intentionally not implemented here.
    # Row-major split of the leading dim -> metadata-only reshape in XLA.
    patch_features = out2d.reshape(G, P, d_model)
    return patch_features, n_vars


def patch_embedding_ref(x, w_value, *, patch_len, stride, padding, d_model,
                        matmul_dtype=jnp.float32):
    """Pure-JAX reference matching the PyTorch forward (eval mode).
    matmul_dtype=bf16 reproduces the kernel's input rounding exactly."""
    B, n_vars, L = x.shape
    x_pad = jnp.pad(x, ((0, 0), (0, 0), (0, padding)), mode="edge")
    P = (L + padding - patch_len) // stride + 1
    idx = jnp.arange(P)[:, None] * stride + jnp.arange(patch_len)[None, :]
    patches = x_pad[:, :, idx].reshape(B * n_vars, P, patch_len)
    p_c = patches.astype(matmul_dtype).astype(jnp.float32)
    w_c = w_value.astype(matmul_dtype).astype(jnp.float32)
    val = jnp.einsum("mpk,kd->mpd", p_c, w_c, precision=jax.lax.Precision.HIGHEST)
    pe = sinusoidal_pe(P, d_model)
    return val + pe[None], n_vars


if __name__ == "__main__":
    d_model, patch_len, stride, padding = 32, 16, 8, 8   # dropout -> identity (eval)
    B, n_vars, L = 2, 4, 64

    key = jax.random.PRNGKey(0)
    kx, kw = jax.random.split(key)
    x = jax.random.normal(kx, (B, n_vars, L), jnp.float32)
    # nn.Linear(patch_len, d_model, bias=False) weight, stored transposed (in, out).
    w_value = jax.random.normal(kw, (patch_len, d_model), jnp.float32) / math.sqrt(patch_len)

    out, n_out = patch_embedding(
        x, w_value, patch_len=patch_len, stride=stride, padding=padding, d_model=d_model
    )
    out = jax.block_until_ready(out)

    num_patches = (L + padding - patch_len) // stride + 1
    assert out.shape == (B * n_vars, num_patches, d_model), out.shape
    assert n_out == n_vars

    # Tight check against a reference with identical bf16 input rounding.
    ref_bf16, _ = patch_embedding_ref(
        x, w_value, patch_len=patch_len, stride=stride, padding=padding,
        d_model=d_model, matmul_dtype=jnp.bfloat16)
    assert jnp.allclose(out, ref_bf16, atol=1e-3, rtol=1e-3), "mismatch vs bf16 reference"

    # Loose sanity check against the full-f32 reference (bf16 rounding only).
    ref_f32, _ = patch_embedding_ref(
        x, w_value, patch_len=patch_len, stride=stride, padding=padding, d_model=d_model)
    assert jnp.allclose(out, ref_f32, atol=0.25, rtol=0.1), "mismatch vs f32 reference"

    print("KERNEL_OK")
</pallas_src>

<mosaic_0001>
module attributes {stable_mosaic.version = 11 : i64} {
  func.func @patch_embed_kernel(%arg0: i32, %arg1: memref<32x16xbf16, #tpu.memory_space<vmem>>, %arg2: memref<16x32xbf16, #tpu.memory_space<vmem>>, %arg3: memref<32x32xf32, #tpu.memory_space<vmem>>, %arg4: memref<32x32xf32, #tpu.memory_space<vmem>>) attributes {dimension_semantics = [#tpu.dimension_semantics<parallel>], iteration_bounds = array<i64: 2>, scalar_prefetch = 0 : i64, scratch_operands = 0 : i64, tpu.core_type = #tpu.core_type<tc>, window_params = [{transform_indices = @transform_0, window_bounds = array<i64: 32, 16>}, {pipeline_mode = #tpu.pipeline_mode<synchronous>, transform_indices = @transform_1, window_bounds = array<i64: 16, 32>}, {pipeline_mode = #tpu.pipeline_mode<synchronous>, transform_indices = @transform_2, window_bounds = array<i64: 32, 32>}, {transform_indices = @transform_3, window_bounds = array<i64: 32, 32>}]} {
    %c0 = arith.constant 0 : index
    %c0_0 = arith.constant 0 : index
    %0 = vector.load %arg1[%c0, %c0_0] : memref<32x16xbf16, #tpu.memory_space<vmem>>, vector<32x16xbf16>
    %c0_1 = arith.constant 0 : index
    %c0_2 = arith.constant 0 : index
    %1 = vector.load %arg2[%c0_1, %c0_2] : memref<16x32xbf16, #tpu.memory_space<vmem>>, vector<16x32xbf16>
    %cst = arith.constant dense<0.000000e+00> : vector<32x32xf32>
    %2 = tpu.matmul %0, %1, %cst {dimension_numbers = #tpu.dot_dimension_numbers<[1], [0], [0], [1], [0, 0, 1, 1], [], []>} : vector<32x16xbf16>, vector<16x32xbf16>, vector<32x32xf32> -> vector<32x32xf32>
    %c0_3 = arith.constant 0 : index
    %c0_4 = arith.constant 0 : index
    %3 = vector.load %arg3[%c0_3, %c0_4] : memref<32x32xf32, #tpu.memory_space<vmem>>, vector<32x32xf32>
    %4 = arith.addf %2, %3 : vector<32x32xf32>
    %c0_5 = arith.constant 0 : index
    %c0_6 = arith.constant 0 : index
    %5 = vector.load %arg4[%c0_5, %c0_6] : memref<32x32xf32, #tpu.memory_space<vmem>>, vector<32x32xf32>
    tpu.vector_store %arg4[%c0_5, %c0_6], %4 {strides = array<i32>} : memref<32x32xf32, #tpu.memory_space<vmem>>, vector<32x32xf32>,
    return
  }
  func.func @transform_0(%arg0: i32) -> (i32, i32) {
    %c0_i32 = arith.constant 0 : i32
    %c0_i32_0 = arith.constant 0 : i32
    return %arg0, %c0_i32 : i32, i32
  }
  func.func @transform_1(%arg0: i32) -> (i32, i32) {
    %c0_i32 = arith.constant 0 : i32
    %c0_i32_0 = arith.constant 0 : i32
    %c0_i32_1 = arith.constant 0 : i32
    return %c0_i32, %c0_i32_0 : i32, i32
  }
  func.func @transform_2(%arg0: i32) -> (i32, i32) {
    %c0_i32 = arith.constant 0 : i32
    %c0_i32_0 = arith.constant 0 : i32
    %c0_i32_1 = arith.constant 0 : i32
    return %c0_i32, %c0_i32_0 : i32, i32
  }
  func.func @transform_3(%arg0: i32) -> (i32, i32) {
    %c0_i32 = arith.constant 0 : i32
    %c0_i32_0 = arith.constant 0 : i32
    return %arg0, %c0_i32 : i32, i32
  }
}

</mosaic_0001>

<llo_original>
// kernel: tpu_custom_call.1
$region0: #{tpu_custom_call.1}
  #allocation0 [shape = 'u32[]', space=smem, size = 0x4, offset = 0x4, fixed_abs, tag = 'smem constant byte address 0x4 - core index']
  #allocation1 [shape = 'u32[144,128]{1,0:T(1,128)}', space=vmem, size = 0x12000, scoped, tag = 'internal scratch']
  %s0 = inlined_call_operand.vmem [shape: bf16[64,16], index: 0, kind: input, shape index: {}]
  %s1 = inlined_call_operand.vmem [shape: bf16[16,32], index: 1, kind: input, shape index: {}]
  %s2 = inlined_call_operand.vmem [shape: f32[32,32], index: 2, kind: input, shape index: {}]
  %s3 = inlined_call_operand.vmem [shape: f32[64,32], index: 3, kind: output, shape index: {}]
  %s4 = sld [smem:[#allocation0]]
  $region45: #{tpu_custom_call.1} parent=0
    _
  %s6 = ssub.s32 1, %s4
  %s7 = scalar_select 0, %s6, %s4
  loop: start=0, step=1, limit=4
  $region2: #{tpu_custom_call.1} parent=0 // loop_pre_header
    _
  $region3: #{tpu_custom_call.1} parent=0 // loop_header
    %s9 = sphi 0, %s13
    %p10 = scmp.ge.s32.totalorder %s9, 4
    %s19 = sphi 0, %s21
    %s22 = sphi 0, %s19
    %s23 = sphi 0, %s22
    %s39 = sphi 0, %s23
    %s43 = sphi 0, %s43
    %s45 = sphi 0, %s43
    %s46 = sphi 0, %s45
    %s60 = sphi 0, %s46
    %s64 = sphi 0, %s64
    %s66 = sphi 0, %s64
    %s67 = sphi 0, %s66
    %s81 = sphi 0, %s67
    %s87 = sphi 0, %s89
    %s90 = sphi 0, %s87
    %s91 = sphi 0, %s90
    %s107 = sphi 0, %s91
  $region4: #{tpu_custom_call.1} parent=0 // loop_header_branch
    %12 = sbr.rel (%p10) target = $region8
  $region5: #{tpu_custom_call.1} parent=0 // loop_body
    %s14 = ssub.s32 %s9, 1
    %s15 = ssub.s32 %s9, 2
    %s16 = sadd.s32 %s9, 1
    %s17 = ssub.s32 %s9, %s16
    %p18 = scmp.eq.s32.totalorder %s17, 0
    %s20 = sadd.s32 %s19, 1
    %s21 = scalar_select %p18, %s19, %s20
    %p24 = pneg %p18
    %p25 = scmp.eq.s32.totalorder %s9, 1
    %p26 = por %p24, %p25
    %p27 = scmp.ne.s32.totalorder %s19, %s22
    %p28 = scmp.eq.s32.totalorder %s9, 0
    %p29 = por %p27, %p28
    %p30 = scmp.ne.s32.totalorder %s19, %s22
    %p31 = scmp.eq.s32.totalorder %s14, 1
    %p32 = por %p30, %p31
    %p33 = scmp.ne.s32.totalorder %s22, %s23
    %p34 = scmp.eq.s32.totalorder %s14, 0
    %p35 = por %p33, %p34
    %p36 = scmp.ne.s32.totalorder %s22, %s23
    %p37 = scmp.eq.s32.totalorder %s15, 1
    %p38 = por %p36, %p37
    %p40 = scmp.ne.s32.totalorder %s23, %s39
    %p41 = scmp.eq.s32.totalorder %s15, 0
    %p42 = por %p40, %p41
    %s44 = sadd.s32 %s43, 1
    %p47 = scmp.eq.s32.totalorder %s9, 1
    %p48 = scmp.ne.s32.totalorder %s43, %s45
    %p49 = scmp.eq.s32.totalorder %s9, 0
    %p50 = por %p48, %p49
    %p51 = scmp.ne.s32.totalorder %s43, %s45
    %p52 = scmp.eq.s32.totalorder %s14, 1
    %p53 = por %p51, %p52
    %p54 = scmp.ne.s32.totalorder %s45, %s46
    %p55 = scmp.eq.s32.totalorder %s14, 0
    %p56 = por %p54, %p55
    %p57 = scmp.ne.s32.totalorder %s45, %s46
    %p58 = scmp.eq.s32.totalorder %s15, 1
    %p59 = por %p57, %p58
    %p61 = scmp.ne.s32.totalorder %s46, %s60
    %p62 = scmp.eq.s32.totalorder %s15, 0
    %p63 = por %p61, %p62
    %s65 = sadd.s32 %s64, 1
    %p68 = scmp.eq.s32.totalorder %s9, 1
    %p69 = scmp.ne.s32.totalorder %s64, %s66
    %p70 = scmp.eq.s32.totalorder %s9, 0
    %p71 = por %p69, %p70
    %p72 = scmp.ne.s32.totalorder %s64, %s66
    %p73 = scmp.eq.s32.totalorder %s14, 1
    %p74 = por %p72, %p73
    %p75 = scmp.ne.s32.totalorder %s66, %s67
    %p76 = scmp.eq.s32.totalorder %s14, 0
    %p77 = por %p75, %p76
    %p78 = scmp.ne.s32.totalorder %s66, %s67
    %p79 = scmp.eq.s32.totalorder %s15, 1
    %p80 = por %p78, %p79
    %p82 = scmp.ne.s32.totalorder %s67, %s81
    %p83 = scmp.eq.s32.totalorder %s15, 0
    %p84 = por %p82, %p83
    %s85 = ssub.s32 %s9, %s16
    %p86 = scmp.eq.s32.totalorder %s85, 0
    %s88 = sadd.s32 %s87, 1
    %s89 = scalar_select %p86, %s87, %s88
    %p92 = pneg %p86
    %p93 = scmp.eq.s32.totalorder %s9, 1
    %p94 = por %p92, %p93
    %p95 = scmp.ne.s32.totalorder %s87, %s90
    %p96 = scmp.eq.s32.totalorder %s9, 0
    %p97 = por %p95, %p96
    %p98 = scmp.ne.s32.totalorder %s87, %s90
    %p99 = scmp.eq.s32.totalorder %s14, 1
    %p100 = por %p98, %p99
    %p101 = scmp.ne.s32.totalorder %s90, %s91
    %p102 = scmp.eq.s32.totalorder %s14, 0
    %p103 = por %p101, %p102
    %p104 = scmp.ne.s32.totalorder %s90, %s91
    %p105 = scmp.eq.s32.totalorder %s15, 1
    %p106 = por %p104, %p105
    %p108 = scmp.ne.s32.totalorder %s91, %s107
    %p109 = scmp.eq.s32.totalorder %s15, 0
    %p110 = por %p108, %p109
    %p111 = scmp.le.s32.totalorder 1, %s9
    %p112 = scmp.lt.s32.totalorder %s9, 3
    %p113 = pnand %p111, %p112
    %p114 = pneg %p113
    // Predicated region
    $region9: #{tpu_custom_call.1} parent=5 // pred_check
      _
    $region10: #{tpu_custom_call.1} parent=5 // pred_check_branch
      %116 = sbr.rel (%p113) target = $region12
    $region11: #{tpu_custom_call.1} parent=5 // pred_region
      %s117 = ssub.s32 %s9, 1
      // Predicated region
      $region13: #{tpu_custom_call.1} parent=11 // pred_check
        %p118 = pneg %p56
      $region14: #{tpu_custom_call.1} parent=11 // pred_check_branch
        %120 = sbr.rel (%p118) target = $region16
      $region15: #{tpu_custom_call.1} parent=11 // pred_region
        _
      $region16: #{tpu_custom_call.1} parent=11 // pred_fallthru
        _
      // Predicated region
      $region17: #{tpu_custom_call.1} parent=11 // pred_check
        %p121 = pneg %p77
      $region18: #{tpu_custom_call.1} parent=11 // pred_check_branch
        %123 = sbr.rel (%p121) target = $region20
      $region19: #{tpu_custom_call.1} parent=11 // pred_region
        _
      $region20: #{tpu_custom_call.1} parent=11 // pred_fallthru
        _
    $region12: #{tpu_custom_call.1} parent=5 // pred_fallthru
      _
    %p124 = scmp.lt.s32.totalorder %s9, 2
    // Predicated region
    $region21: #{tpu_custom_call.1} parent=5 // pred_check
      %p125 = pneg %p124
    $region22: #{tpu_custom_call.1} parent=5 // pred_check_branch
      %127 = sbr.rel (%p125) target = $region24
    $region23: #{tpu_custom_call.1} parent=5 // pred_region
      // Predicated region
      $region25: #{tpu_custom_call.1} parent=23 // pred_check
        %p128 = pneg %p29
      $region26: #{tpu_custom_call.1} parent=23 // pred_check_branch
        %130 = sbr.rel (%p128) target = $region28
      $region27: #{tpu_custom_call.1} parent=23 // pred_region
        %s131 = smul.u32 4, %s9
        %p132 = scmp.lt.s32.totalorder %s131, 7
        %s133 = scalar_select %p132, %s131, 7
        %s134 = smul.addr %s133, 4
        %s135 = scalar_lea.vmem %s0, %s134
        %s136 = smul.u32 4, %s9
      $region28: #{tpu_custom_call.1} parent=23 // pred_fallthru
        _
    $region24: #{tpu_custom_call.1} parent=5 // pred_fallthru
      _
    %p137 = scmp.le.s32.totalorder 1, %s9
    %p138 = scmp.lt.s32.totalorder %s9, 3
    %p139 = pnand %p137, %p138
    %p140 = pneg %p139
    // Predicated region
    $region29: #{tpu_custom_call.1} parent=5 // pred_check
      _
    $region30: #{tpu_custom_call.1} parent=5 // pred_check_branch
      %142 = sbr.rel (%p139) target = $region32
    $region31: #{tpu_custom_call.1} parent=5 // pred_region
      %s143 = ssub.s32 %s9, 1
      %s144 = smul.u32 4, %s14
      %p145 = scmp.lt.s32.totalorder %s144, 7
      %s146 = scalar_select %p145, %s144, 7
      %s147 = smul.addr %s146, 4
      %s148 = scalar_lea.vmem %s0, %s147
      %p149 = pneg %p35
      %p150 = pneg %p32
      %p151 = pneg %p56
      %p152 = pneg %p53
      %p153 = pneg %p77
      %p154 = pneg %p74
      %p155 = pneg %p103
      %p156 = pneg %p100
      %s157 = smul.u32 4, %s14
      %p158 = scmp.lt.s32.totalorder %s157, 7
      %s159 = scalar_select %p158, %s157, 7
      %s160 = smul.addr %s159, 8
      %s161 = scalar_lea.vmem %s3, %s160
      %s162 = smul.u32 4, %s14
      %p163 = scmp.lt.s32.totalorder %s162, 7
      %s164 = scalar_select %p163, %s162, 7
      %s165 = smul.addr %s164, 4
      %s166 = scalar_lea.vmem %s0, %s165
      %s167 = smul.u32 4, %s14
      %s168 = smul.u32 4, %s14
      %p169 = scmp.lt.s32.totalorder %s168, 7
      %s170 = scalar_select %p169, %s168, 7
      %s171 = smul.addr %s170, 8
      %s172 = scalar_lea.vmem %s3, %s171
      %s173 = smul.u32 4, %s14
      %v175 = vld [vmem:[%s166] sm:$0xf]
      %v176 = vld [vmem:[%s166 + $0x4] sm:$0xf]
      %v177 = vld [vmem:[%s166 + $0x8] sm:$0xf]
      %v178 = vld [vmem:[%s166 + $0xc] sm:$0xf]
      %v179 = vld [vmem:[%s1] sm:$0xf]
      %v180 = vld [vmem:[%s1 + $0x4] sm:$0xf]
      %v181 = vld [vmem:[%s2] sm:$0xff]
      %v182 = vld [vmem:[%s2 + $0x8] sm:$0xff]
      %v183 = vld [vmem:[%s2 + $0x10] sm:$0xff]
      %v184 = vld [vmem:[%s2 + $0x18] sm:$0xff]
      %v189 = vunpack.c.l.b16 %v175
      %v190 = vunpack.c.l.b16 %v176
      %v191 = vunpack.c.l.b16 %v177
      %v192 = vunpack.c.l.b16 %v178
      %v193 = vpack.c.b16 %v190, %v189
      %v194 = vpack.c.b16 %v192, %v191
      %v197 = vunpack.c.l.b16 %v179
      %v198 = vunpack.c.l.b16 %v180
      %v199 = vpack.c.b16 %v198, %v197
      %vm201 = vcmask 130048
      %v203 = vsel %vm201, %v193, 0
      %v206 = vsel %vm201, %v194, 0
      %208 = vmatprep.subr.bf16.mxu0 0
      %209 = vmatpush1.bf16.msra.mxu0 0
      %210 = vmatprep.subr.bf16.mxu0 0
      %211 = vmatpush1.bf16.msra.mxu0 0
      %212 = vmatprep.subr.bf16.mxu0 0
      %213 = vmatpush1.bf16.msra.mxu0 0
      %214 = vmatprep.subr.bf16.mxu0 0
      %215 = vmatpush1.bf16.msra.mxu0 0
      %216 = vmatprep.subr.bf16.mxu0 0
      %217 = vmatpush1.bf16.msra.mxu0 0
      %218 = vmatprep.subr.bf16.mxu0 0
      %219 = vmatpush1.bf16.msra.mxu0 0
      %220 = vmatprep.subr.bf16.mxu0 0
      %221 = vmatpush1.bf16.msra.mxu0 0
      %222 = vmatprep.subr.bf16.mxu0 0
      %223 = vmatpush1.bf16.msra.mxu0 %v199
      %224 = vmatprep.subr.bf16.mxu0 0
      %225 = vmatpush2.bf16.msra.mxu0 0
      %226 = vmatprep.subr.bf16.mxu0 0
      %227 = vmatpush2.bf16.msra.mxu0 0
      %228 = vmatprep.subr.bf16.mxu0 0
      %229 = vmatpush2.bf16.msra.mxu0 0
      %230 = vmatprep.subr.bf16.mxu0 0
      %231 = vmatpush2.bf16.msra.mxu0 0
      %232 = vmatprep.subr.bf16.mxu0 0
      %233 = vmatpush2.bf16.msra.mxu0 0
      %234 = vmatprep.subr.bf16.mxu0 0
      %235 = vmatpush2.bf16.msra.mxu0 0
      %236 = vmatprep.subr.bf16.mxu0 0
      %237 = vmatpush2.bf16.msra.mxu0 0
      %238 = vmatprep.subr.bf16.mxu0 0
      %239 = vmatpush2.bf16.msra.mxu0 0
      %240 = vmatprep.mubr.bf16.mxu0 0
      %241 = vmatmul.mubr.bf16.gmra.mxu0 %v203
      %v242 = vpop.f32.mrf.mxu0
      %v243 = vadd.f32 %v181, %v242
      %v244 = vpop.f32.mrf.mxu0
      %v245 = vpop.f32.mrf.mxu0
      %v246 = vadd.f32 %v182, %v245
      %v247 = vpop.f32.mrf.mxu0
      %248 = vmatprep.mubr.bf16.mxu0 0
      %249 = vmatmul.mubr.bf16.gmra.mxu0 %v206
      %v250 = vpop.f32.mrf.mxu0
      %v251 = vadd.f32 %v183, %v250
      %v252 = vpop.f32.mrf.mxu0
      %v253 = vpop.f32.mrf.mxu0
      %v254 = vadd.f32 %v184, %v253
      %v255 = vpop.f32.mrf.mxu0
      %256 = vdwg.mxu0
      %vm257 = vcmask 261120
      %258 = vst.msk [vmem:[%s172] sm:$0xff] %vm257, %v243
      %259 = vst.msk [vmem:[%s172 + $0x8] sm:$0xff] %vm257, %v246
      %260 = vst.msk [vmem:[%s172 + $0x10] sm:$0xff] %vm257, %v251
      %261 = vst.msk [vmem:[%s172 + $0x18] sm:$0xff] %vm257, %v254
      %s262 = smul.u32 4, %s14
      %p263 = scmp.lt.s32.totalorder %s262, 7
      %s264 = scalar_select %p263, %s262, 7
      %s265 = smul.addr %s264, 8
      %s266 = scalar_lea.vmem %s3, %s265
      // Predicated region
      $region33: #{tpu_custom_call.1} parent=31 // pred_check
        %p267 = pneg %p100
      $region34: #{tpu_custom_call.1} parent=31 // pred_check_branch
        %269 = sbr.rel (%p267) target = $region36
      $region35: #{tpu_custom_call.1} parent=31 // pred_region
        %s270 = smul.u32 4, %s14
      $region36: #{tpu_custom_call.1} parent=31 // pred_fallthru
        _
    $region32: #{tpu_custom_call.1} parent=5 // pred_fallthru
      _
    %p271 = scmp.le.s32.totalorder 2, %s9
    // Predicated region
    $region37: #{tpu_custom_call.1} parent=5 // pred_check
      %p272 = pneg %p271
    $region38: #{tpu_custom_call.1} parent=5 // pred_check_branch
      %274 = sbr.rel (%p272) target = $region40
    $region39: #{tpu_custom_call.1} parent=5 // pred_region
      %s275 = ssub.s32 %s9, 2
      // Predicated region
      $region41: #{tpu_custom_call.1} parent=39 // pred_check
        %p276 = pneg %p106
      $region42: #{tpu_custom_call.1} parent=39 // pred_check_branch
        %278 = sbr.rel (%p276) target = $region44
      $region43: #{tpu_custom_call.1} parent=39 // pred_region
        %s279 = smul.u32 4, %s15
        %p280 = scmp.lt.s32.totalorder %s279, 7
        %s281 = scalar_select %p280, %s279, 7
        %s282 = smul.addr %s281, 8
        %s283 = scalar_lea.vmem %s3, %s282
      $region44: #{tpu_custom_call.1} parent=39 // pred_fallthru
        _
    $region40: #{tpu_custom_call.1} parent=5 // pred_fallthru
      _
  $region6: #{tpu_custom_call.1} parent=0 // loop_footer
    %s13 = sadd.s32 1, %s9
  $region7: #{tpu_custom_call.1} parent=0 // loop_footer_branch
    %8 = sbr.rel target = $region3
  $region8: #{tpu_custom_call.1} parent=0 // loop_exit
    _

</llo_original>
